<compile_context>
chip_gen: v5e
topology: v5e:2x2
jax: 0.10.0
libtpu: 0.0.40
codegen_flags: <defaults>
</compile_context>

<pallas_src>
import jax
import jax.numpy as jnp
from jax.experimental import pallas as pl
from jax.experimental.pallas import tpu as pltpu


# ---------------------------------------------------------------------------
# Pallas kernel: one batch block per grid step.
# ---------------------------------------------------------------------------
def attn_decoder_kernel(h_ref, win_ref, feat_ref, out_ref):
    # h_ref:    (BB, Q)     query rows (h_t block)
    # win_ref:  (Q, F)      linear_in weight, pre-transposed (grid-resident)
    # feat_ref: (BB, C, F)  candidate features for this batch block
    # out_ref:  (BB, C)     pre-softmax logits
    target = jnp.dot(h_ref[...], win_ref[...],
                     preferred_element_type=jnp.float32)            # (BB, F)  MXU
    # bmm(context, target) as VPU multiply + lane-F reduce (F stays on lanes).
    prod = feat_ref[...].astype(jnp.float32) * target[:, None, :]   # (BB, C, F)
    out_ref[...] = jnp.sum(prod, axis=-1).astype(out_ref.dtype)     # (BB, C)


# ---------------------------------------------------------------------------
# Wrapper
# ---------------------------------------------------------------------------
def attn_decoder_forward(h_t, cand_feat, w_in, *, block_b=8):
    """h_t: (B, Q), cand_feat: (B, C, F), w_in: (F, Q) -> logit (B, C)."""
    B, Q = h_t.shape
    _, C, F = cand_feat.shape
    # TODO(synk): train-mode feature dropout (drop_env on cand_feat[..., :-angle_feat_size])
    # is identity at inference and is not implemented here.

    w_in_t = jnp.transpose(w_in)          # (Q, F) -- no transpose inside the kernel

    bb = min(block_b, B)
    h_pad = h_t
    feat_pad = cand_feat
    if B % bb != 0:                        # pad batch so it tiles evenly (8-aligned blocks)
        pad = bb - (B % bb)
        h_pad = jnp.pad(h_pad, ((0, pad), (0, 0)))
        feat_pad = jnp.pad(feat_pad, ((0, pad), (0, 0), (0, 0)))
    Bp = h_pad.shape[0]
    grid = (Bp // bb,)

    flops = 2.0 * Bp * Q * F + 2.0 * Bp * C * F
    bytes_accessed = 4.0 * (Bp * Q + Q * F + Bp * C * F + Bp * C)

    # VMEM budget: double-buffered blocks + resident weight + headroom.
    block_bytes = 4 * (bb * Q + bb * C * F + bb * C)
    vmem_limit = int(min(max(4 * block_bytes + 4 * Q * F + (8 << 20), 16 << 20),
                         48 << 20))

    logit = pl.pallas_call(
        attn_decoder_kernel,
        out_shape=jax.ShapeDtypeStruct((Bp, C), jnp.float32),
        grid=grid,
        in_specs=[
            pl.BlockSpec((bb, Q), lambda i: (i, 0)),
            pl.BlockSpec((Q, F), lambda i: (0, 0)),        # resident across grid
            pl.BlockSpec((bb, C, F), lambda i: (i, 0, 0)),  # streamed / pipelined
        ],
        out_specs=pl.BlockSpec((bb, C), lambda i: (i, 0)),
        compiler_params=pltpu.CompilerParams(
            dimension_semantics=("parallel",),
            vmem_limit_bytes=vmem_limit,
        ),
        cost_estimate=pl.CostEstimate(
            flops=int(flops),
            transcendentals=0,
            bytes_accessed=int(bytes_accessed),
        ),
    )(h_pad, w_in_t, feat_pad)
    return logit[:B]


# ---------------------------------------------------------------------------
# Pure-JAX reference (for correctness check)
# ---------------------------------------------------------------------------
def attn_decoder_ref(h_t, cand_feat, w_in):
    target = h_t @ w_in.T                                   # (B, F)
    return jnp.einsum('bcf,bf->bc', cand_feat, target)      # (B, C) pre-softmax logit


# ---------------------------------------------------------------------------
# Main
# ---------------------------------------------------------------------------
if __name__ == "__main__":
    B, C = 16, 12          # batch, number of candidate views
    Q, F = 64, 68          # query dim (768 in the real model), feature_size (2048+4)

    key = jax.random.PRNGKey(0)
    k_h, k_f, k_w = jax.random.split(key, 3)

    h_t = jax.random.normal(k_h, (B, Q), jnp.float32)
    cand_feat = jax.random.normal(k_f, (B, C, F), jnp.float32)
    # candidate_att_layer.linear_in = nn.Linear(query_dim, ctx_dim, bias=False)
    # -> weight shape (ctx_dim, query_dim) = (F, Q)
    w_in = 0.1 * jax.random.normal(k_w, (F, Q), jnp.float32)

    logit = attn_decoder_forward(h_t, cand_feat, w_in)
    logit = jax.block_until_ready(logit)

    ref = attn_decoder_ref(h_t, cand_feat, w_in)
    assert logit.shape == (B, C), logit.shape
    assert jnp.allclose(logit, ref, rtol=1e-3, atol=1e-3), "mismatch vs JAX reference"

    print("KERNEL_OK")
</pallas_src>

<mosaic_0001>
module attributes {stable_mosaic.version = 11 : i64} {
  func.func @attn_decoder_kernel(%arg0: i32, %arg1: memref<8x64xf32, #tpu.memory_space<vmem>>, %arg2: memref<64x68xf32, #tpu.memory_space<vmem>>, %arg3: memref<8x12x68xf32, #tpu.memory_space<vmem>>, %arg4: memref<8x12xf32, #tpu.memory_space<vmem>>) attributes {dimension_semantics = [#tpu.dimension_semantics<parallel>], iteration_bounds = array<i64: 2>, scalar_prefetch = 0 : i64, scratch_operands = 0 : i64, tpu.core_type = #tpu.core_type<tc>, window_params = [{transform_indices = @transform_0, window_bounds = array<i64: 8, 64>}, {pipeline_mode = #tpu.pipeline_mode<synchronous>, transform_indices = @transform_1, window_bounds = array<i64: 64, 68>}, {transform_indices = @transform_2, window_bounds = array<i64: 8, 12, 68>}, {transform_indices = @transform_3, window_bounds = array<i64: 8, 12>}]} {
    %c0 = arith.constant 0 : index
    %c0_0 = arith.constant 0 : index
    %0 = vector.load %arg1[%c0, %c0_0] : memref<8x64xf32, #tpu.memory_space<vmem>>, vector<8x64xf32>
    %c0_1 = arith.constant 0 : index
    %c0_2 = arith.constant 0 : index
    %1 = vector.load %arg2[%c0_1, %c0_2] : memref<64x68xf32, #tpu.memory_space<vmem>>, vector<64x68xf32>
    %cst = arith.constant dense<0.000000e+00> : vector<8x68xf32>
    %2 = tpu.matmul %0, %1, %cst {dimension_numbers = #tpu.dot_dimension_numbers<[1], [0], [0], [1], [0, 0, 1, 1], [], []>} : vector<8x64xf32>, vector<64x68xf32>, vector<8x68xf32> -> vector<8x68xf32>
    %c0_3 = arith.constant 0 : index
    %c0_4 = arith.constant 0 : index
    %c0_5 = arith.constant 0 : index
    %3 = vector.load %arg3[%c0_3, %c0_4, %c0_5] : memref<8x12x68xf32, #tpu.memory_space<vmem>>, vector<8x12x68xf32>
    %4 = vector.shape_cast %2 : vector<8x68xf32> to vector<8x1x68xf32>
    %5 = vector.broadcast %4 : vector<8x1x68xf32> to vector<8x12x68xf32>
    %6 = arith.mulf %3, %5 : vector<8x12x68xf32>
    %cst_6 = arith.constant dense<0.000000e+00> : vector<8x12xf32>
    %7 = vector.multi_reduction <add>, %6, %cst_6 [2] : vector<8x12x68xf32> to vector<8x12xf32>
    %c0_7 = arith.constant 0 : index
    %c0_8 = arith.constant 0 : index
    %8 = vector.load %arg4[%c0_7, %c0_8] : memref<8x12xf32, #tpu.memory_space<vmem>>, vector<8x12xf32>
    tpu.vector_store %arg4[%c0_7, %c0_8], %7 {strides = array<i32>} : memref<8x12xf32, #tpu.memory_space<vmem>>, vector<8x12xf32>,
    return
  }
  func.func @transform_0(%arg0: i32) -> (i32, i32) {
    %c0_i32 = arith.constant 0 : i32
    %c0_i32_0 = arith.constant 0 : i32
    return %arg0, %c0_i32 : i32, i32
  }
  func.func @transform_1(%arg0: i32) -> (i32, i32) {
    %c0_i32 = arith.constant 0 : i32
    %c0_i32_0 = arith.constant 0 : i32
    %c0_i32_1 = arith.constant 0 : i32
    return %c0_i32, %c0_i32_0 : i32, i32
  }
  func.func @transform_2(%arg0: i32) -> (i32, i32, i32) {
    %c0_i32 = arith.constant 0 : i32
    %c0_i32_0 = arith.constant 0 : i32
    %c0_i32_1 = arith.constant 0 : i32
    return %arg0, %c0_i32, %c0_i32_0 : i32, i32, i32
  }
  func.func @transform_3(%arg0: i32) -> (i32, i32) {
    %c0_i32 = arith.constant 0 : i32
    %c0_i32_0 = arith.constant 0 : i32
    return %arg0, %c0_i32 : i32, i32
  }
}

</mosaic_0001>

<llo_original>
// kernel: tpu_custom_call.1
$region0: #{tpu_custom_call.1}
  #allocation0 [shape = 'u32[]', space=smem, size = 0x4, offset = 0x4, fixed_abs, tag = 'smem constant byte address 0x4 - core index']
  #allocation1 [shape = 'u32[72,128]{1,0:T(1,128)}', space=vmem, size = 0x9000, scoped, tag = 'internal scratch']
  %s0 = inlined_call_operand.vmem [shape: f32[16,64], index: 0, kind: input, shape index: {}]
  %s1 = inlined_call_operand.vmem [shape: f32[64,68], index: 1, kind: input, shape index: {}]
  %s2 = inlined_call_operand.vmem [shape: f32[16,12,68], index: 2, kind: input, shape index: {}]
  %s3 = inlined_call_operand.hbm [shape: f32[16,12], index: 3, kind: output, shape index: {}]
  %s4 = sld [smem:[#allocation0]]
  $region45: #{tpu_custom_call.1} parent=0
    _
  %s6 = ssub.s32 1, %s4
  %s7 = scalar_select 0, %s6, %s4
  $region1: #{tpu_custom_call.1} parent=0
    #allocation2 [shape = 'u8[8192]{0}', space=vmem, size = 0x2000, scoped, tag = 'output window, operand 0']
    #allocation3 [shape = 's32[2]{0}', space=sflag, size = 0x8, scoped, tag = 'scoped memory for tpu_custom_call.1']
    %8 = vsyncpa [#allocation3], 0
    %s9 = scalar_lea.sflag [#allocation3], 1
    %10 = vsyncpa %s9, 0
    loop: start=0, step=1, limit=4
    $region2: #{tpu_custom_call.1} parent=1 // loop_pre_header
      _
    $region3: #{tpu_custom_call.1} parent=1 // loop_header
      %s12 = sphi 0, %s16
      %p13 = scmp.ge.s32.totalorder %s12, 4
      %s22 = sphi 0, %s24
      %s25 = sphi 0, %s22
      %s26 = sphi 0, %s25
      %s42 = sphi 0, %s26
      %s46 = sphi 0, %s46
      %s48 = sphi 0, %s46
      %s49 = sphi 0, %s48
      %s63 = sphi 0, %s49
      %s69 = sphi 0, %s71
      %s72 = sphi 0, %s69
      %s73 = sphi 0, %s72
      %s89 = sphi 0, %s73
      %s95 = sphi 0, %s97
      %s98 = sphi 0, %s95
      %s99 = sphi 0, %s98
      %s115 = sphi 0, %s99
    $region4: #{tpu_custom_call.1} parent=1 // loop_header_branch
      %15 = sbr.rel (%p13) target = $region8
    $region5: #{tpu_custom_call.1} parent=1 // loop_body
      %s17 = ssub.s32 %s12, 1
      %s18 = ssub.s32 %s12, 2
      %s19 = sadd.s32 %s12, 1
      %s20 = ssub.s32 %s12, %s19
      %p21 = scmp.eq.s32.totalorder %s20, 0
      %s23 = sadd.s32 %s22, 1
      %s24 = scalar_select %p21, %s22, %s23
      %p27 = pneg %p21
      %p28 = scmp.eq.s32.totalorder %s12, 1
      %p29 = por %p27, %p28
      %p30 = scmp.ne.s32.totalorder %s22, %s25
      %p31 = scmp.eq.s32.totalorder %s12, 0
      %p32 = por %p30, %p31
      %p33 = scmp.ne.s32.totalorder %s22, %s25
      %p34 = scmp.eq.s32.totalorder %s17, 1
      %p35 = por %p33, %p34
      %p36 = scmp.ne.s32.totalorder %s25, %s26
      %p37 = scmp.eq.s32.totalorder %s17, 0
      %p38 = por %p36, %p37
      %p39 = scmp.ne.s32.totalorder %s25, %s26
      %p40 = scmp.eq.s32.totalorder %s18, 1
      %p41 = por %p39, %p40
      %p43 = scmp.ne.s32.totalorder %s26, %s42
      %p44 = scmp.eq.s32.totalorder %s18, 0
      %p45 = por %p43, %p44
      %s47 = sadd.s32 %s46, 1
      %p50 = scmp.eq.s32.totalorder %s12, 1
      %p51 = scmp.ne.s32.totalorder %s46, %s48
      %p52 = scmp.eq.s32.totalorder %s12, 0
      %p53 = por %p51, %p52
      %p54 = scmp.ne.s32.totalorder %s46, %s48
      %p55 = scmp.eq.s32.totalorder %s17, 1
      %p56 = por %p54, %p55
      %p57 = scmp.ne.s32.totalorder %s48, %s49
      %p58 = scmp.eq.s32.totalorder %s17, 0
      %p59 = por %p57, %p58
      %p60 = scmp.ne.s32.totalorder %s48, %s49
      %p61 = scmp.eq.s32.totalorder %s18, 1
      %p62 = por %p60, %p61
      %p64 = scmp.ne.s32.totalorder %s49, %s63
      %p65 = scmp.eq.s32.totalorder %s18, 0
      %p66 = por %p64, %p65
      %s67 = ssub.s32 %s12, %s19
      %p68 = scmp.eq.s32.totalorder %s67, 0
      %s70 = sadd.s32 %s69, 1
      %s71 = scalar_select %p68, %s69, %s70
      %p74 = pneg %p68
      %p75 = scmp.eq.s32.totalorder %s12, 1
      %p76 = por %p74, %p75
      %p77 = scmp.ne.s32.totalorder %s69, %s72
      %p78 = scmp.eq.s32.totalorder %s12, 0
      %p79 = por %p77, %p78
      %p80 = scmp.ne.s32.totalorder %s69, %s72
      %p81 = scmp.eq.s32.totalorder %s17, 1
      %p82 = por %p80, %p81
      %p83 = scmp.ne.s32.totalorder %s72, %s73
      %p84 = scmp.eq.s32.totalorder %s17, 0
      %p85 = por %p83, %p84
      %p86 = scmp.ne.s32.totalorder %s72, %s73
      %p87 = scmp.eq.s32.totalorder %s18, 1
      %p88 = por %p86, %p87
      %p90 = scmp.ne.s32.totalorder %s73, %s89
      %p91 = scmp.eq.s32.totalorder %s18, 0
      %p92 = por %p90, %p91
      %s93 = ssub.s32 %s12, %s19
      %p94 = scmp.eq.s32.totalorder %s93, 0
      %s96 = sadd.s32 %s95, 1
      %s97 = scalar_select %p94, %s95, %s96
      %p100 = pneg %p94
      %p101 = scmp.eq.s32.totalorder %s12, 1
      %p102 = por %p100, %p101
      %p103 = scmp.ne.s32.totalorder %s95, %s98
      %p104 = scmp.eq.s32.totalorder %s12, 0
      %p105 = por %p103, %p104
      %p106 = scmp.ne.s32.totalorder %s95, %s98
      %p107 = scmp.eq.s32.totalorder %s17, 1
      %p108 = por %p106, %p107
      %p109 = scmp.ne.s32.totalorder %s98, %s99
      %p110 = scmp.eq.s32.totalorder %s17, 0
      %p111 = por %p109, %p110
      %p112 = scmp.ne.s32.totalorder %s98, %s99
      %p113 = scmp.eq.s32.totalorder %s18, 1
      %p114 = por %p112, %p113
      %p116 = scmp.ne.s32.totalorder %s99, %s115
      %p117 = scmp.eq.s32.totalorder %s18, 0
      %p118 = por %p116, %p117
      %p119 = scmp.le.s32.totalorder 1, %s12
      %p120 = scmp.lt.s32.totalorder %s12, 3
      %p121 = pnand %p119, %p120
      %p122 = pneg %p121
      // Predicated region
      $region9: #{tpu_custom_call.1} parent=5 // pred_check
        _
      $region10: #{tpu_custom_call.1} parent=5 // pred_check_branch
        %124 = sbr.rel (%p121) target = $region12
      $region11: #{tpu_custom_call.1} parent=5 // pred_region
        %s125 = ssub.s32 %s12, 1
        // Predicated region
        $region13: #{tpu_custom_call.1} parent=11 // pred_check
          %p126 = pneg %p59
        $region14: #{tpu_custom_call.1} parent=11 // pred_check_branch
          %128 = sbr.rel (%p126) target = $region16
        $region15: #{tpu_custom_call.1} parent=11 // pred_region
          _
        $region16: #{tpu_custom_call.1} parent=11 // pred_fallthru
          _
      $region12: #{tpu_custom_call.1} parent=5 // pred_fallthru
        _
      %p129 = scmp.lt.s32.totalorder %s12, 2
      // Predicated region
      $region17: #{tpu_custom_call.1} parent=5 // pred_check
        %p130 = pneg %p129
      $region18: #{tpu_custom_call.1} parent=5 // pred_check_branch
        %132 = sbr.rel (%p130) target = $region20
      $region19: #{tpu_custom_call.1} parent=5 // pred_region
        // Predicated region
        $region21: #{tpu_custom_call.1} parent=19 // pred_check
          %p133 = pneg %p32
        $region22: #{tpu_custom_call.1} parent=19 // pred_check_branch
          %135 = sbr.rel (%p133) target = $region24
        $region23: #{tpu_custom_call.1} parent=19 // pred_region
          %p136 = scmp.lt.s32.totalorder %s12, 1
          %s137 = scalar_select %p136, %s12, 1
          %s138 = smul.addr %s137, 8
          %s139 = scalar_lea.vmem %s0, %s138
        $region24: #{tpu_custom_call.1} parent=19 // pred_fallthru
          _
        // Predicated region
        $region25: #{tpu_custom_call.1} parent=19 // pred_check
          %p140 = pneg %p79
        $region26: #{tpu_custom_call.1} parent=19 // pred_check_branch
          %142 = sbr.rel (%p140) target = $region28
        $region27: #{tpu_custom_call.1} parent=19 // pred_region
          %s143 = smul.u32 8, %s12
          %p144 = scmp.lt.s32.totalorder %s143, 15
          %s145 = scalar_select %p144, %s143, 15
          %s146 = smul.addr %s145, 2
          %s147 = smul.addr %s146, 8
          %s148 = scalar_lea.vmem %s2, %s147
          %s149 = smul.u32 8, %s12
        $region28: #{tpu_custom_call.1} parent=19 // pred_fallthru
          _
      $region20: #{tpu_custom_call.1} parent=5 // pred_fallthru
        _
      %p150 = scmp.le.s32.totalorder 1, %s12
      %p151 = scmp.lt.s32.totalorder %s12, 3
      %p152 = pnand %p150, %p151
      %p153 = pneg %p152
      // Predicated region
      $region29: #{tpu_custom_call.1} parent=5 // pred_check
        _
      $region30: #{tpu_custom_call.1} parent=5 // pred_check_branch
        %155 = sbr.rel (%p152) target = $region32
      $region31: #{tpu_custom_call.1} parent=5 // pred_region
        %s156 = ssub.s32 %s12, 1
        %p157 = scmp.lt.s32.totalorder %s17, 1
        %s158 = scalar_select %p157, %s17, 1
        %s159 = smul.addr %s158, 8
        %s160 = scalar_lea.vmem %s0, %s159
        %p161 = pneg %p38
        %p162 = pneg %p35
        %p163 = pneg %p59
        %p164 = pneg %p56
        %s165 = smul.u32 8, %s17
        %p166 = scmp.lt.s32.totalorder %s165, 15
        %s167 = scalar_select %p166, %s165, 15
        %s168 = smul.addr %s167, 2
        %s169 = smul.addr %s168, 8
        %s170 = scalar_lea.vmem %s2, %s169
        %p171 = pneg %p85
        %p172 = pneg %p82
        %p173 = pneg %p111
        %p174 = pneg %p108
        %s175 = sand.u32 %s98, 1
        %s176 = scalar_lea.sflag [#allocation3], %s175
        %s177 = sand.u32 %s98, 1
        %s178 = smul.addr %s177, 8
        %s179 = scalar_lea.vmem [#allocation2], %s178
        %p180 = scmp.lt.s32.totalorder %s17, 1
        %s181 = scalar_select %p180, %s17, 1
        %s182 = smul.addr %s181, 8
        %s183 = scalar_lea.vmem %s0, %s182
        %s184 = smul.u32 8, %s17
        %p185 = scmp.lt.s32.totalorder %s184, 15
        %s186 = scalar_select %p185, %s184, 15
        %s187 = smul.addr %s186, 2
        %s188 = smul.addr %s187, 8
        %s189 = scalar_lea.vmem %s2, %s188
        %s190 = smul.u32 8, %s17
        %v191 = vld [vmem:[%s183] sm:$0xff]
        %v192 = vld [vmem:[%s1] sm:$0xff]
        %v193 = vld [vmem:[%s1 + $0x8] sm:$0xff]
        %v194 = vld [vmem:[%s1 + $0x10] sm:$0xff]
        %v195 = vld [vmem:[%s1 + $0x18] sm:$0xff]
        %v196 = vld [vmem:[%s1 + $0x20] sm:$0xff]
        %v197 = vld [vmem:[%s1 + $0x28] sm:$0xff]
        %v198 = vld [vmem:[%s1 + $0x30] sm:$0xff]
        %v199 = vld [vmem:[%s1 + $0x38] sm:$0xff]
        %vm200 = vcmask 523264
        %v202 = vsel %vm200, %v191, 0
        %204 = vmatpush.msra.mxu0 0.0
        %205 = vmatpush.msra.mxu0 0.0
        %206 = vmatpush.msra.mxu0 0.0
        %207 = vmatpush.msra.mxu0 0.0
        %208 = vmatpush.msra.mxu0 0.0
        %209 = vmatpush.msra.mxu0 0.0
        %210 = vmatpush.msra.mxu0 0.0
        %211 = vmatpush.msra.mxu0 0.0
        %212 = vmatpush.msra.mxu0 %v199
        %213 = vmatpush.msra.mxu0 %v198
        %214 = vmatpush.msra.mxu0 %v197
        %215 = vmatpush.msra.mxu0 %v196
        %216 = vmatpush.msra.mxu0 %v195
        %217 = vmatpush.msra.mxu0 %v194
        %218 = vmatpush.msra.mxu0 %v193
        %219 = vmatpush.msra.mxu0 %v192
        %220 = vmatmul.f32.gmra.mxu0 %v202
        %v221 = vpop.f32.mrf.mxu0
        %v222 = vadd.f32 0.0, %v221
        %223 = vdwg.mxu0
        %v224 = vld [vmem:[%s189] sm:$0xff]
        %v225 = vld [vmem:[%s189 + $0x8] sm:$0xf]
        %v226 = vld [vmem:[%s189 + $0x10] sm:$0xff]
        %v227 = vld [vmem:[%s189 + $0x18] sm:$0xf]
        %v228 = vld [vmem:[%s189 + $0x20] sm:$0xff]
        %v229 = vld [vmem:[%s189 + $0x28] sm:$0xf]
        %v230 = vld [vmem:[%s189 + $0x30] sm:$0xff]
        %v231 = vld [vmem:[%s189 + $0x38] sm:$0xf]
        %v232 = vld [vmem:[%s189 + $0x40] sm:$0xff]
        %v233 = vld [vmem:[%s189 + $0x48] sm:$0xf]
        %v234 = vld [vmem:[%s189 + $0x50] sm:$0xff]
        %v235 = vld [vmem:[%s189 + $0x58] sm:$0xf]
        %v236 = vld [vmem:[%s189 + $0x60] sm:$0xff]
        %v237 = vld [vmem:[%s189 + $0x68] sm:$0xf]
        %v238 = vld [vmem:[%s189 + $0x70] sm:$0xff]
        %v239 = vld [vmem:[%s189 + $0x78] sm:$0xf]
        %v241 = vrot.slane %v222, 1
        %v242 = vrot.slane %v222, 2
        %v243 = vrot.slane %v222, 3
        %v244 = vrot.slane %v222, 4
        %v245 = vrot.slane %v222, 5
        %v246 = vrot.slane %v222, 6
        %v247 = vrot.slane %v222, 7
        %v248 = vperm.slane %v222, 0
        %v249 = vperm.slane %v241, 0
        %v250 = vperm.slane %v242, 0
        %v251 = vperm.slane %v243, 0
        %v252 = vperm.slane %v244, 0
        %v253 = vperm.slane %v245, 0
        %v254 = vperm.slane %v246, 0
        %v255 = vperm.slane %v247, 0
        %v264 = vmul.f32 %v224, %v248
        %v265 = vmul.f32 %v225, %v248
        %v266 = vmul.f32 %v226, %v249
        %v267 = vmul.f32 %v227, %v249
        %v268 = vmul.f32 %v228, %v250
        %v269 = vmul.f32 %v229, %v250
        %v270 = vmul.f32 %v230, %v251
        %v271 = vmul.f32 %v231, %v251
        %v272 = vmul.f32 %v232, %v252
        %v273 = vmul.f32 %v233, %v252
        %v274 = vmul.f32 %v234, %v253
        %v275 = vmul.f32 %v235, %v253
        %v276 = vmul.f32 %v236, %v254
        %v277 = vmul.f32 %v237, %v254
        %v278 = vmul.f32 %v238, %v255
        %v279 = vmul.f32 %v239, %v255
        %vm280 = vcmask 556032
        %v281 = vsel %vm280, %v264, 0.0
        %282 = vadd.xlane.f32.xlu0 %v281
        %v283 = vpop.xlane.xlu0 %282
        %vm284 = vcmask 551936
        %v285 = vsel %vm284, %v265, 0.0
        %286 = vadd.xlane.f32.xlu0 %v285
        %v287 = vpop.xlane.xlu0 %286
        %v288 = vsel %vm280, %v266, 0.0
        %289 = vadd.xlane.f32.xlu0 %v288
        %v290 = vpop.xlane.xlu0 %289
        %v291 = vsel %vm284, %v267, 0.0
        %292 = vadd.xlane.f32.xlu0 %v291
        %v293 = vpop.xlane.xlu0 %292
        %v294 = vsel %vm280, %v268, 0.0
        %295 = vadd.xlane.f32.xlu0 %v294
        %v296 = vpop.xlane.xlu0 %295
        %v297 = vsel %vm284, %v269, 0.0
        %298 = vadd.xlane.f32.xlu0 %v297
        %v299 = vpop.xlane.xlu0 %298
        %v300 = vsel %vm280, %v270, 0.0
        %301 = vadd.xlane.f32.xlu0 %v300
        %v302 = vpop.xlane.xlu0 %301
        %v303 = vsel %vm284, %v271, 0.0
        %304 = vadd.xlane.f32.xlu0 %v303
        %v305 = vpop.xlane.xlu0 %304
        %v306 = vsel %vm280, %v272, 0.0
        %307 = vadd.xlane.f32.xlu0 %v306
        %v308 = vpop.xlane.xlu0 %307
        %v309 = vsel %vm284, %v273, 0.0
        %310 = vadd.xlane.f32.xlu0 %v309
        %v311 = vpop.xlane.xlu0 %310
        %v312 = vsel %vm280, %v274, 0.0
        %313 = vadd.xlane.f32.xlu0 %v312
        %v314 = vpop.xlane.xlu0 %313
        %v315 = vsel %vm284, %v275, 0.0
        %316 = vadd.xlane.f32.xlu0 %v315
        %v317 = vpop.xlane.xlu0 %316
        %v318 = vsel %vm280, %v276, 0.0
        %319 = vadd.xlane.f32.xlu0 %v318
        %v320 = vpop.xlane.xlu0 %319
        %v321 = vsel %vm284, %v277, 0.0
        %322 = vadd.xlane.f32.xlu0 %v321
        %v323 = vpop.xlane.xlu0 %322
        %v324 = vsel %vm280, %v278, 0.0
        %325 = vadd.xlane.f32.xlu0 %v324
        %v326 = vpop.xlane.xlu0 %325
        %v327 = vsel %vm284, %v279, 0.0
        %328 = vadd.xlane.f32.xlu0 %v327
        %v329 = vpop.xlane.xlu0 %328
        %v346 = vlaneseq
        %v347 = vand.u32 %v346, 127
        %v348 = vperm.slane %v283, %v347
        %v349 = vadd.s32 %v347, 4294967288
        %v350 = vperm.slane %v287, %v349
        %vm351 = vcmask 130112
        %v352 = vsel %vm351, %v350, %v348
        %v353 = vperm.slane %v290, %v347
        %v354 = vperm.slane %v293, %v349
        %v355 = vsel %vm351, %v354, %v353
        %v356 = vperm.slane %v296, %v347
        %v357 = vperm.slane %v299, %v349
        %v358 = vsel %vm351, %v357, %v356
        %v359 = vperm.slane %v302, %v347
        %v360 = vperm.slane %v305, %v349
        %v361 = vsel %vm351, %v360, %v359
        %v362 = vperm.slane %v308, %v347
        %v363 = vperm.slane %v311, %v349
        %v364 = vsel %vm351, %v363, %v362
        %v365 = vperm.slane %v314, %v347
        %v366 = vperm.slane %v317, %v349
        %v367 = vsel %vm351, %v366, %v365
        %v368 = vperm.slane %v320, %v347
        %v369 = vperm.slane %v323, %v349
        %v370 = vsel %vm351, %v369, %v368
        %v371 = vperm.slane %v326, %v347
        %v372 = vperm.slane %v329, %v349
        %v373 = vsel %vm351, %v372, %v371
        %vm374 = vcmask 1041409
        %v375 = vsel %vm374, %v355, %v352
        %vm376 = vcmask 1042434
        %v377 = vsel %vm376, %v358, %v375
        %vm378 = vcmask 1043459
        %v379 = vsel %vm378, %v361, %v377
        %vm380 = vcmask 1044484
        %v381 = vsel %vm380, %v364, %v379
        %vm382 = vcmask 1045509
        %v383 = vsel %vm382, %v367, %v381
        %vm384 = vcmask 1046534
        %v385 = vsel %vm384, %v370, %v383
        %vm386 = vcmask 1047559
        %v387 = vsel %vm386, %v373, %v385
        %vm389 = vcmask 97280
        %390 = vst.msk [vmem:[%s179] sm:$0xff] %vm389, %v387
        %s391 = sand.u32 %s98, 1
        %s392 = scalar_lea.sflag [#allocation3], %s391
        %s393 = sand.u32 %s98, 1
        %s394 = smul.addr %s393, 8
        %s395 = scalar_lea.vmem [#allocation2], %s394
        // Predicated region
        $region33: #{tpu_custom_call.1} parent=31 // pred_check
          %p396 = pneg %p108
        $region34: #{tpu_custom_call.1} parent=31 // pred_check_branch
          %398 = sbr.rel (%p396) target = $region36
        $region35: #{tpu_custom_call.1} parent=31 // pred_region
          %400 = vsyncadd %s392, 0
          %s401 = smul.addr %s17, 8
          %s402 = scalar_lea.hbm %s3, %s401
          %s404 = sshll.u32 %s395, 4
          %s405 = int_to_ptr.vmem [resolvable:$true] %s404
          %s406 = sshll.u32 %s402, 4
          %s407 = int_to_ptr.hbm [resolvable:$true] %s406
          %409 = dma.vmem_to_hbm [thread:$0]  %s405, 128, %s407, %s392
        $region36: #{tpu_custom_call.1} parent=31 // pred_fallthru
          _
      $region32: #{tpu_custom_call.1} parent=5 // pred_fallthru
        _
      %p410 = scmp.le.s32.totalorder 2, %s12
      // Predicated region
      $region37: #{tpu_custom_call.1} parent=5 // pred_check
        %p411 = pneg %p410
      $region38: #{tpu_custom_call.1} parent=5 // pred_check_branch
        %413 = sbr.rel (%p411) target = $region40
      $region39: #{tpu_custom_call.1} parent=5 // pred_region
        %s414 = ssub.s32 %s12, 2
        // Predicated region
        $region41: #{tpu_custom_call.1} parent=39 // pred_check
          %p415 = pneg %p114
        $region42: #{tpu_custom_call.1} parent=39 // pred_check_branch
          %417 = sbr.rel (%p415) target = $region44
        $region43: #{tpu_custom_call.1} parent=39 // pred_region
          %s418 = sand.u32 %s99, 1
          %s419 = scalar_lea.sflag [#allocation3], %s418
          %s420 = sand.u32 %s99, 1
          %s421 = smul.addr %s420, 8
          %s422 = scalar_lea.vmem [#allocation2], %s421
          %424 = dma.done %s419, 128
        $region44: #{tpu_custom_call.1} parent=39 // pred_fallthru
          _
      $region40: #{tpu_custom_call.1} parent=5 // pred_fallthru
        _
    $region6: #{tpu_custom_call.1} parent=1 // loop_footer
      %s16 = sadd.s32 1, %s12
    $region7: #{tpu_custom_call.1} parent=1 // loop_footer_branch
      %11 = sbr.rel target = $region3
    $region8: #{tpu_custom_call.1} parent=1 // loop_exit
      _
    %425 = vsyncpa [#allocation3], 1
    %s426 = scalar_lea.sflag [#allocation3], 1
    %427 = vsyncpa %s426, 1

</llo_original>
